<compile_context>
chip_gen: v5e
topology: v5e:2x2
jax: 0.10.0
libtpu: 0.0.40
codegen_flags: <defaults>
</compile_context>

<pallas_src>
import jax
import jax.numpy as jnp
from jax.experimental import pallas as pl
from jax.experimental.pallas import tpu as pltpu

NUM_CLASSES = 10
PADDED_CLASSES = 128          # lane-dense output width
IN_FEATURES = 28 * 28


def _cdiv(a, b):
    return -(-a // b)


def _ceil_to(n, m):
    return _cdiv(n, m) * m


def mlp_kernel(x_ref, w1_ref, b1_ref, w2_ref, b2_ref, w3_ref, b3_ref,
               w4_ref, b4_ref, o_ref):
    """Fused 4-layer MLP + log_softmax for one batch tile.

    MXU matmuls in bf16 with f32 accumulation; bias/ReLU and the softmax
    epilogue in f32.  fc4 columns are padded to 128 and masked before the
    log_softmax statistics so the normalization only sees the 10 real classes.
    """
    # fc1 + ReLU
    h = jnp.dot(x_ref[...], w1_ref[...], preferred_element_type=jnp.float32)
    h = jnp.maximum(h + b1_ref[...], 0.0)
    # fc2 + ReLU
    h = jnp.dot(h.astype(jnp.bfloat16), w2_ref[...],
                preferred_element_type=jnp.float32)
    h = jnp.maximum(h + b2_ref[...], 0.0)
    # fc3 + ReLU
    h = jnp.dot(h.astype(jnp.bfloat16), w3_ref[...],
                preferred_element_type=jnp.float32)
    h = jnp.maximum(h + b3_ref[...], 0.0)
    # fc4 (N padded 10 -> 128 with zero weight columns)
    logits = jnp.dot(h.astype(jnp.bfloat16), w4_ref[...],
                     preferred_element_type=jnp.float32)
    logits = logits + b4_ref[...]

    # Mask padded lanes so they do not perturb max / exp-sum.
    col = jax.lax.broadcasted_iota(jnp.int32, logits.shape, dimension=1)
    logits = jnp.where(col < NUM_CLASSES, logits, -1e30)

    # Numerically stable log_softmax along the last axis.
    m = jnp.max(logits, axis=-1, keepdims=True)
    shifted = logits - m
    lse = jnp.log(jnp.sum(jnp.exp(shifted), axis=-1, keepdims=True))
    o_ref[...] = shifted - lse


def my_awesome_model_forward(x, params, *, tile_b=512):
    """x: (B, 1, 28, 28) float32 NCHW. Returns (B, 10) log-probabilities."""
    if x.ndim != 4:
        raise ValueError("Expected input to be a 4D tensor")
    if x.shape[1] != 1 or x.shape[2] != 28 or x.shape[3] != 28:
        raise ValueError("Expected each sample to have the shape 1x28x28")

    B = x.shape[0]
    x_flat = x.reshape(B, IN_FEATURES)          # same as torch .view(B, -1)

    w1, b1, w2, b2, w3, b3, w4, b4 = params

    # --- pick the batch tile: big (MXU-friendly), multiple of 8, and keep
    # >= 2 grid steps when the batch allows it (v7x dual TensorCore). ---
    b8 = _ceil_to(B, 8)
    grid_n = max(1, _cdiv(b8, max(8, tile_b)))
    if b8 > 8 and grid_n < 2:
        grid_n = 2
    tile = _ceil_to(_cdiv(b8, grid_n), 8)
    b_pad = tile * grid_n
    if b_pad != B:
        x_flat = jnp.pad(x_flat, ((0, b_pad - B), (0, 0)))

    # bf16 activations/weights for the MXU; biases stay f32.
    x_bf16 = x_flat.astype(jnp.bfloat16)
    w1b = w1.astype(jnp.bfloat16)
    w2b = w2.astype(jnp.bfloat16)
    w3b = w3.astype(jnp.bfloat16)
    # Pad fc4 to a lane-dense 128-wide output (zeros; masked in-kernel).
    w4p = jnp.pad(w4, ((0, 0), (0, PADDED_CLASSES - NUM_CLASSES))).astype(jnp.bfloat16)
    b4p = jnp.pad(b4, ((0, 0), (0, PADDED_CLASSES - NUM_CLASSES)))

    def resident(arr):
        # Same full block at every grid step -> DMA'd once, stays in VMEM.
        zeros = (0,) * arr.ndim
        return pl.BlockSpec(arr.shape, lambda i: zeros)

    out = pl.pallas_call(
        mlp_kernel,
        out_shape=jax.ShapeDtypeStruct((b_pad, PADDED_CLASSES), jnp.float32),
        grid_spec=pltpu.PrefetchScalarGridSpec(
            num_scalar_prefetch=0,
            grid=(grid_n,),
            in_specs=[
                pl.BlockSpec((tile, IN_FEATURES), lambda i: (i, 0)),  # x
                resident(w1b), resident(b1),                          # fc1
                resident(w2b), resident(b2),                          # fc2
                resident(w3b), resident(b3),                          # fc3
                resident(w4p), resident(b4p),                         # fc4
            ],
            out_specs=pl.BlockSpec((tile, PADDED_CLASSES), lambda i: (i, 0)),
        ),
        compiler_params=pltpu.CompilerParams(
            dimension_semantics=("parallel",),
            vmem_limit_bytes=32 * 1024 * 1024,
        ),
    )(x_bf16, w1b, b1, w2b, b2, w3b, b3, w4p, b4p)

    # Drop padded batch rows and padded class lanes.
    return out[:B, :NUM_CLASSES]


def init_params(key):
    """Deterministic init matching nn.Linear shapes (stored as (in, out))."""
    sizes = [(IN_FEATURES, 256), (256, 128), (128, 64), (64, NUM_CLASSES)]
    params = []
    for fan_in, fan_out in sizes:
        key, kw, kb = jax.random.split(key, 3)
        bound = 1.0 / jnp.sqrt(fan_in)
        w = jax.random.uniform(kw, (fan_in, fan_out), jnp.float32, -bound, bound)
        b = jax.random.uniform(kb, (1, fan_out), jnp.float32, -bound, bound)
        params += [w, b]
    return tuple(params)


def reference_forward(x, params):
    """Pure-JAX reference using the same bf16-matmul / f32-accumulate recipe."""
    w1, b1, w2, b2, w3, b3, w4, b4 = params
    h = x.reshape(x.shape[0], -1).astype(jnp.bfloat16)
    for w, b in ((w1, b1), (w2, b2), (w3, b3)):
        h = jnp.dot(h, w.astype(jnp.bfloat16),
                    preferred_element_type=jnp.float32)
        h = jnp.maximum(h + b, 0.0).astype(jnp.bfloat16)
    logits = jnp.dot(h, w4.astype(jnp.bfloat16),
                     preferred_element_type=jnp.float32) + b4
    return jax.nn.log_softmax(logits, axis=-1)


if __name__ == "__main__":
    key = jax.random.PRNGKey(0)
    k_x, k_p = jax.random.split(key)

    B = 8
    x = jax.random.normal(k_x, (B, 1, 28, 28), dtype=jnp.float32)
    params = init_params(k_p)

    out = my_awesome_model_forward(x, params)
    out = jax.block_until_ready(out)

    assert out.shape == (B, NUM_CLASSES)

    # log-probs of each row should (approximately) exp-sum to 1
    row_sums = jnp.exp(out).sum(axis=-1)
    assert bool(jnp.all(jnp.abs(row_sums - 1.0) < 1e-4))

    # match a pure-JAX reference that uses the same bf16/f32 recipe
    ref = jax.block_until_ready(reference_forward(x, params))
    assert bool(jnp.max(jnp.abs(out - ref)) < 2e-2)

    print("KERNEL_OK")
</pallas_src>

<mosaic_0001>
module attributes {stable_mosaic.version = 11 : i64} {
  func.func @mlp_kernel(%arg0: i32, %arg1: memref<8x784xbf16, #tpu.memory_space<vmem>>, %arg2: memref<784x256xbf16, #tpu.memory_space<vmem>>, %arg3: memref<1x256xf32, #tpu.memory_space<vmem>>, %arg4: memref<256x128xbf16, #tpu.memory_space<vmem>>, %arg5: memref<1x128xf32, #tpu.memory_space<vmem>>, %arg6: memref<128x64xbf16, #tpu.memory_space<vmem>>, %arg7: memref<1x64xf32, #tpu.memory_space<vmem>>, %arg8: memref<64x128xbf16, #tpu.memory_space<vmem>>, %arg9: memref<1x128xf32, #tpu.memory_space<vmem>>, %arg10: memref<8x128xf32, #tpu.memory_space<vmem>>) attributes {dimension_semantics = [#tpu.dimension_semantics<parallel>], iteration_bounds = array<i64: 1>, scalar_prefetch = 0 : i64, scratch_operands = 0 : i64, tpu.core_type = #tpu.core_type<tc>, window_params = [{transform_indices = @transform_0, window_bounds = array<i64: 8, 784>}, {pipeline_mode = #tpu.pipeline_mode<synchronous>, transform_indices = @transform_1, window_bounds = array<i64: 784, 256>}, {pipeline_mode = #tpu.pipeline_mode<synchronous>, transform_indices = @transform_2, window_bounds = array<i64: 1, 256>}, {pipeline_mode = #tpu.pipeline_mode<synchronous>, transform_indices = @transform_3, window_bounds = array<i64: 256, 128>}, {pipeline_mode = #tpu.pipeline_mode<synchronous>, transform_indices = @transform_4, window_bounds = array<i64: 1, 128>}, {pipeline_mode = #tpu.pipeline_mode<synchronous>, transform_indices = @transform_5, window_bounds = array<i64: 128, 64>}, {pipeline_mode = #tpu.pipeline_mode<synchronous>, transform_indices = @transform_6, window_bounds = array<i64: 1, 64>}, {pipeline_mode = #tpu.pipeline_mode<synchronous>, transform_indices = @transform_7, window_bounds = array<i64: 64, 128>}, {pipeline_mode = #tpu.pipeline_mode<synchronous>, transform_indices = @transform_8, window_bounds = array<i64: 1, 128>}, {transform_indices = @transform_9, window_bounds = array<i64: 8, 128>}]} {
    %c0 = arith.constant 0 : index
    %c0_0 = arith.constant 0 : index
    %0 = vector.load %arg1[%c0, %c0_0] : memref<8x784xbf16, #tpu.memory_space<vmem>>, vector<8x784xbf16>
    %c0_1 = arith.constant 0 : index
    %c0_2 = arith.constant 0 : index
    %1 = vector.load %arg2[%c0_1, %c0_2] : memref<784x256xbf16, #tpu.memory_space<vmem>>, vector<784x256xbf16>
    %cst = arith.constant dense<0.000000e+00> : vector<8x256xf32>
    %2 = tpu.matmul %0, %1, %cst {dimension_numbers = #tpu.dot_dimension_numbers<[1], [0], [0], [1], [0, 0, 1, 1], [], []>} : vector<8x784xbf16>, vector<784x256xbf16>, vector<8x256xf32> -> vector<8x256xf32>
    %c0_3 = arith.constant 0 : index
    %c0_4 = arith.constant 0 : index
    %3 = vector.load %arg3[%c0_3, %c0_4] : memref<1x256xf32, #tpu.memory_space<vmem>>, vector<1x256xf32>
    %4 = vector.broadcast %3 : vector<1x256xf32> to vector<8x256xf32>
    %5 = arith.addf %2, %4 : vector<8x256xf32>
    %cst_5 = arith.constant 0.000000e+00 : f32
    %6 = vector.broadcast %cst_5 : f32 to vector<8x256xf32>
    %7 = arith.maximumf %5, %6 : vector<8x256xf32>
    %8 = arith.truncf %7 : vector<8x256xf32> to vector<8x256xbf16>
    %c0_6 = arith.constant 0 : index
    %c0_7 = arith.constant 0 : index
    %9 = vector.load %arg4[%c0_6, %c0_7] : memref<256x128xbf16, #tpu.memory_space<vmem>>, vector<256x128xbf16>
    %cst_8 = arith.constant dense<0.000000e+00> : vector<8x128xf32>
    %10 = tpu.matmul %8, %9, %cst_8 {dimension_numbers = #tpu.dot_dimension_numbers<[1], [0], [0], [1], [0, 0, 1, 1], [], []>} : vector<8x256xbf16>, vector<256x128xbf16>, vector<8x128xf32> -> vector<8x128xf32>
    %c0_9 = arith.constant 0 : index
    %c0_10 = arith.constant 0 : index
    %11 = vector.load %arg5[%c0_9, %c0_10] : memref<1x128xf32, #tpu.memory_space<vmem>>, vector<1x128xf32>
    %12 = vector.broadcast %11 : vector<1x128xf32> to vector<8x128xf32>
    %13 = arith.addf %10, %12 : vector<8x128xf32>
    %cst_11 = arith.constant 0.000000e+00 : f32
    %14 = vector.broadcast %cst_11 : f32 to vector<8x128xf32>
    %15 = arith.maximumf %13, %14 : vector<8x128xf32>
    %16 = arith.truncf %15 : vector<8x128xf32> to vector<8x128xbf16>
    %c0_12 = arith.constant 0 : index
    %c0_13 = arith.constant 0 : index
    %17 = vector.load %arg6[%c0_12, %c0_13] : memref<128x64xbf16, #tpu.memory_space<vmem>>, vector<128x64xbf16>
    %cst_14 = arith.constant dense<0.000000e+00> : vector<8x64xf32>
    %18 = tpu.matmul %16, %17, %cst_14 {dimension_numbers = #tpu.dot_dimension_numbers<[1], [0], [0], [1], [0, 0, 1, 1], [], []>} : vector<8x128xbf16>, vector<128x64xbf16>, vector<8x64xf32> -> vector<8x64xf32>
    %c0_15 = arith.constant 0 : index
    %c0_16 = arith.constant 0 : index
    %19 = vector.load %arg7[%c0_15, %c0_16] : memref<1x64xf32, #tpu.memory_space<vmem>>, vector<1x64xf32>
    %20 = vector.broadcast %19 : vector<1x64xf32> to vector<8x64xf32>
    %21 = arith.addf %18, %20 : vector<8x64xf32>
    %cst_17 = arith.constant 0.000000e+00 : f32
    %22 = vector.broadcast %cst_17 : f32 to vector<8x64xf32>
    %23 = arith.maximumf %21, %22 : vector<8x64xf32>
    %24 = arith.truncf %23 : vector<8x64xf32> to vector<8x64xbf16>
    %c0_18 = arith.constant 0 : index
    %c0_19 = arith.constant 0 : index
    %25 = vector.load %arg8[%c0_18, %c0_19] : memref<64x128xbf16, #tpu.memory_space<vmem>>, vector<64x128xbf16>
    %cst_20 = arith.constant dense<0.000000e+00> : vector<8x128xf32>
    %26 = tpu.matmul %24, %25, %cst_20 {dimension_numbers = #tpu.dot_dimension_numbers<[1], [0], [0], [1], [0, 0, 1, 1], [], []>} : vector<8x64xbf16>, vector<64x128xbf16>, vector<8x128xf32> -> vector<8x128xf32>
    %c0_21 = arith.constant 0 : index
    %c0_22 = arith.constant 0 : index
    %27 = vector.load %arg9[%c0_21, %c0_22] : memref<1x128xf32, #tpu.memory_space<vmem>>, vector<1x128xf32>
    %28 = vector.broadcast %27 : vector<1x128xf32> to vector<8x128xf32>
    %29 = arith.addf %26, %28 : vector<8x128xf32>
    %30 = tpu.iota {dimensions = array<i32: 1>} : vector<8x128xi32>
    %c10_i32 = arith.constant 10 : i32
    %31 = vector.broadcast %c10_i32 : i32 to vector<8x128xi32>
    %32 = arith.cmpi slt, %30, %31 : vector<8x128xi32>
    %cst_23 = arith.constant -1.000000e+30 : f32
    %33 = vector.broadcast %cst_23 : f32 to vector<8x128xf32>
    %34 = arith.select %32, %29, %33 : vector<8x128xi1>, vector<8x128xf32>
    %cst_24 = arith.constant dense<0xFF800000> : vector<8xf32>
    %35 = vector.multi_reduction <maximumf>, %34, %cst_24 [1] : vector<8x128xf32> to vector<8xf32>
    %36 = vector.shape_cast %35 : vector<8xf32> to vector<8x1xf32>
    %37 = vector.broadcast %36 : vector<8x1xf32> to vector<8x128xf32>
    %38 = arith.subf %34, %37 : vector<8x128xf32>
    %39 = math.exp %38 : vector<8x128xf32>
    %cst_25 = arith.constant dense<0.000000e+00> : vector<8xf32>
    %40 = vector.multi_reduction <add>, %39, %cst_25 [1] : vector<8x128xf32> to vector<8xf32>
    %41 = vector.shape_cast %40 : vector<8xf32> to vector<8x1xf32>
    %42 = math.log %41 : vector<8x1xf32>
    %43 = vector.broadcast %42 : vector<8x1xf32> to vector<8x128xf32>
    %44 = arith.subf %38, %43 : vector<8x128xf32>
    %c0_26 = arith.constant 0 : index
    %c0_27 = arith.constant 0 : index
    %45 = vector.load %arg10[%c0_26, %c0_27] : memref<8x128xf32, #tpu.memory_space<vmem>>, vector<8x128xf32>
    tpu.vector_store %arg10[%c0_26, %c0_27], %44 {strides = array<i32>} : memref<8x128xf32, #tpu.memory_space<vmem>>, vector<8x128xf32>,
    return
  }
  func.func @transform_0(%arg0: i32) -> (i32, i32) {
    %c0_i32 = arith.constant 0 : i32
    %c0_i32_0 = arith.constant 0 : i32
    return %arg0, %c0_i32 : i32, i32
  }
  func.func @transform_1(%arg0: i32) -> (i32, i32) {
    %c0_i32 = arith.constant 0 : i32
    %c0_i32_0 = arith.constant 0 : i32
    %c0_i32_1 = arith.constant 0 : i32
    return %c0_i32, %c0_i32_0 : i32, i32
  }
  func.func @transform_2(%arg0: i32) -> (i32, i32) {
    %c0_i32 = arith.constant 0 : i32
    %c0_i32_0 = arith.constant 0 : i32
    %c0_i32_1 = arith.constant 0 : i32
    return %c0_i32, %c0_i32_0 : i32, i32
  }
  func.func @transform_3(%arg0: i32) -> (i32, i32) {
    %c0_i32 = arith.constant 0 : i32
    %c0_i32_0 = arith.constant 0 : i32
    %c0_i32_1 = arith.constant 0 : i32
    return %c0_i32, %c0_i32_0 : i32, i32
  }
  func.func @transform_4(%arg0: i32) -> (i32, i32) {
    %c0_i32 = arith.constant 0 : i32
    %c0_i32_0 = arith.constant 0 : i32
    %c0_i32_1 = arith.constant 0 : i32
    return %c0_i32, %c0_i32_0 : i32, i32
  }
  func.func @transform_5(%arg0: i32) -> (i32, i32) {
    %c0_i32 = arith.constant 0 : i32
    %c0_i32_0 = arith.constant 0 : i32
    %c0_i32_1 = arith.constant 0 : i32
    return %c0_i32, %c0_i32_0 : i32, i32
  }
  func.func @transform_6(%arg0: i32) -> (i32, i32) {
    %c0_i32 = arith.constant 0 : i32
    %c0_i32_0 = arith.constant 0 : i32
    %c0_i32_1 = arith.constant 0 : i32
    return %c0_i32, %c0_i32_0 : i32, i32
  }
  func.func @transform_7(%arg0: i32) -> (i32, i32) {
    %c0_i32 = arith.constant 0 : i32
    %c0_i32_0 = arith.constant 0 : i32
    %c0_i32_1 = arith.constant 0 : i32
    return %c0_i32, %c0_i32_0 : i32, i32
  }
  func.func @transform_8(%arg0: i32) -> (i32, i32) {
    %c0_i32 = arith.constant 0 : i32
    %c0_i32_0 = arith.constant 0 : i32
    %c0_i32_1 = arith.constant 0 : i32
    return %c0_i32, %c0_i32_0 : i32, i32
  }
  func.func @transform_9(%arg0: i32) -> (i32, i32) {
    %c0_i32 = arith.constant 0 : i32
    %c0_i32_0 = arith.constant 0 : i32
    return %arg0, %c0_i32 : i32, i32
  }
}

</mosaic_0001>

<llo_original>
// kernel: tpu_custom_call.1
$region0: #{tpu_custom_call.1}
  #allocation0 [shape = 'u32[]', space=smem, size = 0x4, offset = 0x4, fixed_abs, tag = 'smem constant byte address 0x4 - core index']
  #allocation1 [shape = 'u32[72,128]{1,0:T(1,128)}', space=vmem, size = 0x9000, scoped, tag = 'internal scratch']
  %s0 = inlined_call_operand.vmem [shape: bf16[8,784], index: 0, kind: input, shape index: {}]
  %s1 = inlined_call_operand.hbm [shape: bf16[784,256], index: 1, kind: input, shape index: {}]
  %s2 = inlined_call_operand.vmem [shape: f32[1,256], index: 2, kind: input, shape index: {}]
  %s3 = inlined_call_operand.hbm [shape: bf16[256,128], index: 3, kind: input, shape index: {}]
  %s4 = inlined_call_operand.vmem [shape: f32[1,128], index: 4, kind: input, shape index: {}]
  %s5 = inlined_call_operand.vmem [shape: bf16[128,64], index: 5, kind: input, shape index: {}]
  %s6 = inlined_call_operand.vmem [shape: f32[1,64], index: 6, kind: input, shape index: {}]
  %s7 = inlined_call_operand.vmem [shape: bf16[64,128], index: 7, kind: input, shape index: {}]
  %s8 = inlined_call_operand.vmem [shape: f32[1,128], index: 8, kind: input, shape index: {}]
  %s9 = inlined_call_operand.hbm [shape: f32[8,128], index: 9, kind: output, shape index: {}]
  %s10 = sld [smem:[#allocation0]]
  $region54: #{tpu_custom_call.1} parent=0
    _
  %s12 = ssub.s32 1, %s10
  %s13 = scalar_select 0, %s12, %s10
  $region1: #{tpu_custom_call.1} parent=0
    #allocation2 [shape = 'u8[401408]{0}', space=vmem, size = 0x62000, scoped, tag = 'input window, operand 1, single buffered']
    #allocation3 [shape = 's32[1]{0}', space=sflag, size = 0x4, scoped, tag = 'scoped memory for tpu_custom_call.1']
    #allocation4 [shape = 's32[1]{0}', space=sflag, size = 0x4, scoped, tag = 'scoped memory for tpu_custom_call.1']
    #allocation5 [shape = 'u8[65536]{0}', space=vmem, size = 0x10000, scoped, tag = 'input window, operand 3, single buffered']
    #allocation6 [shape = 's32[1]{0}', space=sflag, size = 0x4, scoped, tag = 'scoped memory for tpu_custom_call.1']
    #allocation7 [shape = 'u8[4096]{0}', space=vmem, size = 0x1000, scoped, tag = 'output window, operand 0, single buffered']
    %14 = vsyncpa [#allocation3], 0
    %15 = vsyncpa [#allocation6], 0
    %16 = vsyncpa [#allocation4], 0
    // Predicated region
    $region2: #{tpu_custom_call.1} parent=1 // pred_check
      _
    $region3: #{tpu_custom_call.1} parent=1 // pred_check_branch
      %18 = sbr.rel (0) target = $region5
    $region4: #{tpu_custom_call.1} parent=1 // pred_region
      _
    $region5: #{tpu_custom_call.1} parent=1 // pred_fallthru
      _
    // Predicated region
    $region6: #{tpu_custom_call.1} parent=1 // pred_check
      _
    $region7: #{tpu_custom_call.1} parent=1 // pred_check_branch
      %20 = sbr.rel (0) target = $region9
    $region8: #{tpu_custom_call.1} parent=1 // pred_region
      %22 = vsyncadd [#allocation3], 0
      %s23 = sshll.u32 %s1, 4
      %s24 = int_to_ptr.hbm [resolvable:$true] %s23
      %s25 = sshll.u32 [#allocation2], 4
      %s26 = int_to_ptr.vmem [resolvable:$true] %s25
      %31 = dma.hbm_to_vmem [thread:$0]  %s24, 12544, %s26, [#allocation3], 128, 128, 8
    $region9: #{tpu_custom_call.1} parent=1 // pred_fallthru
      _
    // Predicated region
    $region10: #{tpu_custom_call.1} parent=1 // pred_check
      _
    $region11: #{tpu_custom_call.1} parent=1 // pred_check_branch
      %33 = sbr.rel (0) target = $region13
    $region12: #{tpu_custom_call.1} parent=1 // pred_region
      _
    $region13: #{tpu_custom_call.1} parent=1 // pred_fallthru
      _
    // Predicated region
    $region14: #{tpu_custom_call.1} parent=1 // pred_check
      _
    $region15: #{tpu_custom_call.1} parent=1 // pred_check_branch
      %35 = sbr.rel (0) target = $region17
    $region16: #{tpu_custom_call.1} parent=1 // pred_region
      %37 = vsyncadd [#allocation6], 0
      %s38 = sshll.u32 %s3, 4
      %s39 = int_to_ptr.hbm [resolvable:$true] %s38
      %s40 = sshll.u32 [#allocation5], 4
      %s41 = int_to_ptr.vmem [resolvable:$true] %s40
      %46 = dma.hbm_to_vmem [thread:$0]  %s39, 2048, %s41, [#allocation6], 64, 64, 4
    $region17: #{tpu_custom_call.1} parent=1 // pred_fallthru
      _
    // Predicated region
    $region18: #{tpu_custom_call.1} parent=1 // pred_check
      _
    $region19: #{tpu_custom_call.1} parent=1 // pred_check_branch
      %48 = sbr.rel (0) target = $region21
    $region20: #{tpu_custom_call.1} parent=1 // pred_region
      _
    $region21: #{tpu_custom_call.1} parent=1 // pred_fallthru
      _
    // Predicated region
    $region22: #{tpu_custom_call.1} parent=1 // pred_check
      _
    $region23: #{tpu_custom_call.1} parent=1 // pred_check_branch
      %50 = sbr.rel (0) target = $region25
    $region24: #{tpu_custom_call.1} parent=1 // pred_region
      _
    $region25: #{tpu_custom_call.1} parent=1 // pred_fallthru
      _
    // Predicated region
    $region26: #{tpu_custom_call.1} parent=1 // pred_check
      _
    $region27: #{tpu_custom_call.1} parent=1 // pred_check_branch
      %52 = sbr.rel (0) target = $region29
    $region28: #{tpu_custom_call.1} parent=1 // pred_region
      _
    $region29: #{tpu_custom_call.1} parent=1 // pred_fallthru
      _
    // Predicated region
    $region30: #{tpu_custom_call.1} parent=1 // pred_check
      _
    $region31: #{tpu_custom_call.1} parent=1 // pred_check_branch
      %54 = sbr.rel (0) target = $region33
    $region32: #{tpu_custom_call.1} parent=1 // pred_region
      _
    $region33: #{tpu_custom_call.1} parent=1 // pred_fallthru
      _
    // Predicated region
    $region34: #{tpu_custom_call.1} parent=1 // pred_check
      _
    $region35: #{tpu_custom_call.1} parent=1 // pred_check_branch
      %56 = sbr.rel (0) target = $region37
    $region36: #{tpu_custom_call.1} parent=1 // pred_region
      _
    $region37: #{tpu_custom_call.1} parent=1 // pred_fallthru
      _
    // Predicated region
    $region38: #{tpu_custom_call.1} parent=1 // pred_check
      _
    $region39: #{tpu_custom_call.1} parent=1 // pred_check_branch
      %58 = sbr.rel (0) target = $region41
    $region40: #{tpu_custom_call.1} parent=1 // pred_region
      %60 = dma.done [#allocation3], 12544
    $region41: #{tpu_custom_call.1} parent=1 // pred_fallthru
      _
    // Predicated region
    $region42: #{tpu_custom_call.1} parent=1 // pred_check
      _
    $region43: #{tpu_custom_call.1} parent=1 // pred_check_branch
      %62 = sbr.rel (0) target = $region45
    $region44: #{tpu_custom_call.1} parent=1 // pred_region
      %64 = dma.done [#allocation6], 2048
    $region45: #{tpu_custom_call.1} parent=1 // pred_fallthru
      _
    %v66 = vld [vmem:[%s0] sm:$0xff]
    %v67 = vld [vmem:[%s0 + $0x8] sm:$0xff]
    %v68 = vld [vmem:[%s0 + $0x10] sm:$0xff]
    %v69 = vld [vmem:[%s0 + $0x18] sm:$0xf]
    %v70 = vld [vmem:[#allocation2] sm:$0xff]
    %v71 = vld [vmem:[#allocation2 + $0x8] sm:$0xff]
    %v72 = vld [vmem:[#allocation2 + $0x10] sm:$0xff]
    %v73 = vld [vmem:[#allocation2 + $0x18] sm:$0xff]
    %v74 = vld [vmem:[#allocation2 + $0x20] sm:$0xff]
    %v75 = vld [vmem:[#allocation2 + $0x28] sm:$0xff]
    %v76 = vld [vmem:[#allocation2 + $0x30] sm:$0xff]
    %v77 = vld [vmem:[#allocation2 + $0x38] sm:$0xff]
    %v78 = vld [vmem:[#allocation2 + $0x40] sm:$0xff]
    %v79 = vld [vmem:[#allocation2 + $0x48] sm:$0xff]
    %v80 = vld [vmem:[#allocation2 + $0x50] sm:$0xff]
    %v81 = vld [vmem:[#allocation2 + $0x58] sm:$0xff]
    %v82 = vld [vmem:[#allocation2 + $0x60] sm:$0xff]
    %v83 = vld [vmem:[#allocation2 + $0x68] sm:$0xff]
    %v84 = vld [vmem:[#allocation2 + $0x70] sm:$0xff]
    %v85 = vld [vmem:[#allocation2 + $0x78] sm:$0xff]
    %v86 = vld [vmem:[#allocation2 + $0x80] sm:$0xff]
    %v87 = vld [vmem:[#allocation2 + $0x88] sm:$0xff]
    %v88 = vld [vmem:[#allocation2 + $0x90] sm:$0xff]
    %v89 = vld [vmem:[#allocation2 + $0x98] sm:$0xff]
    %v90 = vld [vmem:[#allocation2 + $0xa0] sm:$0xff]
    %v91 = vld [vmem:[#allocation2 + $0xa8] sm:$0xff]
    %v92 = vld [vmem:[#allocation2 + $0xb0] sm:$0xff]
    %v93 = vld [vmem:[#allocation2 + $0xb8] sm:$0xff]
    %v94 = vld [vmem:[#allocation2 + $0xc0] sm:$0xff]
    %v95 = vld [vmem:[#allocation2 + $0xc8] sm:$0xff]
    %v96 = vld [vmem:[#allocation2 + $0xd0] sm:$0xff]
    %v97 = vld [vmem:[#allocation2 + $0xd8] sm:$0xff]
    %v98 = vld [vmem:[#allocation2 + $0xe0] sm:$0xff]
    %v99 = vld [vmem:[#allocation2 + $0xe8] sm:$0xff]
    %v100 = vld [vmem:[#allocation2 + $0xf0] sm:$0xff]
    %v101 = vld [vmem:[#allocation2 + $0xf8] sm:$0xff]
    %v102 = vld [vmem:[#allocation2 + $0x100] sm:$0xff]
    %v103 = vld [vmem:[#allocation2 + $0x108] sm:$0xff]
    %v104 = vld [vmem:[#allocation2 + $0x110] sm:$0xff]
    %v105 = vld [vmem:[#allocation2 + $0x118] sm:$0xff]
    %v106 = vld [vmem:[#allocation2 + $0x120] sm:$0xff]
    %v107 = vld [vmem:[#allocation2 + $0x128] sm:$0xff]
    %v108 = vld [vmem:[#allocation2 + $0x130] sm:$0xff]
    %v109 = vld [vmem:[#allocation2 + $0x138] sm:$0xff]
    %v110 = vld [vmem:[#allocation2 + $0x140] sm:$0xff]
    %v111 = vld [vmem:[#allocation2 + $0x148] sm:$0xff]
    %v112 = vld [vmem:[#allocation2 + $0x150] sm:$0xff]
    %v113 = vld [vmem:[#allocation2 + $0x158] sm:$0xff]
    %v114 = vld [vmem:[#allocation2 + $0x160] sm:$0xff]
    %v115 = vld [vmem:[#allocation2 + $0x168] sm:$0xff]
    %v116 = vld [vmem:[#allocation2 + $0x170] sm:$0xff]
    %v117 = vld [vmem:[#allocation2 + $0x178] sm:$0xff]
    %v118 = vld [vmem:[#allocation2 + $0x180] sm:$0xff]
    %v119 = vld [vmem:[#allocation2 + $0x188] sm:$0xff]
    %v120 = vld [vmem:[#allocation2 + $0x190] sm:$0xff]
    %v121 = vld [vmem:[#allocation2 + $0x198] sm:$0xff]
    %v122 = vld [vmem:[#allocation2 + $0x1a0] sm:$0xff]
    %v123 = vld [vmem:[#allocation2 + $0x1a8] sm:$0xff]
    %v124 = vld [vmem:[#allocation2 + $0x1b0] sm:$0xff]
    %v125 = vld [vmem:[#allocation2 + $0x1b8] sm:$0xff]
    %v126 = vld [vmem:[#allocation2 + $0x1c0] sm:$0xff]
    %v127 = vld [vmem:[#allocation2 + $0x1c8] sm:$0xff]
    %v128 = vld [vmem:[#allocation2 + $0x1d0] sm:$0xff]
    %v129 = vld [vmem:[#allocation2 + $0x1d8] sm:$0xff]
    %v130 = vld [vmem:[#allocation2 + $0x1e0] sm:$0xff]
    %v131 = vld [vmem:[#allocation2 + $0x1e8] sm:$0xff]
    %v132 = vld [vmem:[#allocation2 + $0x1f0] sm:$0xff]
    %v133 = vld [vmem:[#allocation2 + $0x1f8] sm:$0xff]
    %v134 = vld [vmem:[#allocation2 + $0x200] sm:$0xff]
    %v135 = vld [vmem:[#allocation2 + $0x208] sm:$0xff]
    %v136 = vld [vmem:[#allocation2 + $0x210] sm:$0xff]
    %v137 = vld [vmem:[#allocation2 + $0x218] sm:$0xff]
    %v138 = vld [vmem:[#allocation2 + $0x220] sm:$0xff]
    %v139 = vld [vmem:[#allocation2 + $0x228] sm:$0xff]
    %v140 = vld [vmem:[#allocation2 + $0x230] sm:$0xff]
    %v141 = vld [vmem:[#allocation2 + $0x238] sm:$0xff]
    %v142 = vld [vmem:[#allocation2 + $0x240] sm:$0xff]
    %v143 = vld [vmem:[#allocation2 + $0x248] sm:$0xff]
    %v144 = vld [vmem:[#allocation2 + $0x250] sm:$0xff]
    %v145 = vld [vmem:[#allocation2 + $0x258] sm:$0xff]
    %v146 = vld [vmem:[#allocation2 + $0x260] sm:$0xff]
    %v147 = vld [vmem:[#allocation2 + $0x268] sm:$0xff]
    %v148 = vld [vmem:[#allocation2 + $0x270] sm:$0xff]
    %v149 = vld [vmem:[#allocation2 + $0x278] sm:$0xff]
    %v150 = vld [vmem:[#allocation2 + $0x280] sm:$0xff]
    %v151 = vld [vmem:[#allocation2 + $0x288] sm:$0xff]
    %v152 = vld [vmem:[#allocation2 + $0x290] sm:$0xff]
    %v153 = vld [vmem:[#allocation2 + $0x298] sm:$0xff]
    %v154 = vld [vmem:[#allocation2 + $0x2a0] sm:$0xff]
    %v155 = vld [vmem:[#allocation2 + $0x2a8] sm:$0xff]
    %v156 = vld [vmem:[#allocation2 + $0x2b0] sm:$0xff]
    %v157 = vld [vmem:[#allocation2 + $0x2b8] sm:$0xff]
    %v158 = vld [vmem:[#allocation2 + $0x2c0] sm:$0xff]
    %v159 = vld [vmem:[#allocation2 + $0x2c8] sm:$0xff]
    %v160 = vld [vmem:[#allocation2 + $0x2d0] sm:$0xff]
    %v161 = vld [vmem:[#allocation2 + $0x2d8] sm:$0xff]
    %v162 = vld [vmem:[#allocation2 + $0x2e0] sm:$0xff]
    %v163 = vld [vmem:[#allocation2 + $0x2e8] sm:$0xff]
    %v164 = vld [vmem:[#allocation2 + $0x2f0] sm:$0xff]
    %v165 = vld [vmem:[#allocation2 + $0x2f8] sm:$0xff]
    %v166 = vld [vmem:[#allocation2 + $0x300] sm:$0xff]
    %v167 = vld [vmem:[#allocation2 + $0x308] sm:$0xff]
    %v168 = vld [vmem:[%s2] sm:$0x3]
    %v170 = vperm.slane %v168, 0
    %v171 = vperm.slane %v168, 1
    %v178 = vunpack.c.l.b16 %v66
    %v179 = vunpack.c.h.b16 %v66
    %v180 = vunpack.c.l.b16 %v67
    %v181 = vunpack.c.h.b16 %v67
    %v182 = vunpack.c.l.b16 %v68
    %v183 = vunpack.c.h.b16 %v68
    %v184 = vunpack.c.l.b16 %v69
    %v185 = vpack.c.b16 %v178, %v178
    %v186 = vpack.c.b16 %v179, %v179
    %v187 = vpack.c.b16 %v180, %v180
    %v188 = vpack.c.b16 %v181, %v181
    %v189 = vpack.c.b16 %v182, %v182
    %v190 = vpack.c.b16 %v183, %v183
    %v191 = vpack.c.b16 %v184, %v184
    %v296 = vunpack.c.l.b16 %v70
    %v297 = vunpack.c.h.b16 %v70
    %v298 = vunpack.c.l.b16 %v71
    %v299 = vunpack.c.h.b16 %v71
    %v300 = vunpack.c.l.b16 %v72
    %v301 = vunpack.c.h.b16 %v72
    %v302 = vunpack.c.l.b16 %v73
    %v303 = vunpack.c.h.b16 %v73
    %v304 = vunpack.c.l.b16 %v74
    %v305 = vunpack.c.h.b16 %v74
    %v306 = vunpack.c.l.b16 %v75
    %v307 = vunpack.c.h.b16 %v75
    %v308 = vunpack.c.l.b16 %v76
    %v309 = vunpack.c.h.b16 %v76
    %v310 = vunpack.c.l.b16 %v77
    %v311 = vunpack.c.h.b16 %v77
    %v312 = vunpack.c.l.b16 %v78
    %v313 = vunpack.c.h.b16 %v78
    %v314 = vunpack.c.l.b16 %v79
    %v315 = vunpack.c.h.b16 %v79
    %v316 = vunpack.c.l.b16 %v80
    %v317 = vunpack.c.h.b16 %v80
    %v318 = vunpack.c.l.b16 %v81
    %v319 = vunpack.c.h.b16 %v81
    %v320 = vunpack.c.l.b16 %v82
    %v321 = vunpack.c.h.b16 %v82
    %v322 = vunpack.c.l.b16 %v83
    %v323 = vunpack.c.h.b16 %v83
    %v324 = vunpack.c.l.b16 %v84
    %v325 = vunpack.c.h.b16 %v84
    %v326 = vunpack.c.l.b16 %v85
    %v327 = vunpack.c.h.b16 %v85
    %v328 = vunpack.c.l.b16 %v86
    %v329 = vunpack.c.h.b16 %v86
    %v330 = vunpack.c.l.b16 %v87
    %v331 = vunpack.c.h.b16 %v87
    %v332 = vunpack.c.l.b16 %v88
    %v333 = vunpack.c.h.b16 %v88
    %v334 = vunpack.c.l.b16 %v89
    %v335 = vunpack.c.h.b16 %v89
    %v336 = vunpack.c.l.b16 %v90
    %v337 = vunpack.c.h.b16 %v90
    %v338 = vunpack.c.l.b16 %v91
    %v339 = vunpack.c.h.b16 %v91
    %v340 = vunpack.c.l.b16 %v92
    %v341 = vunpack.c.h.b16 %v92
    %v342 = vunpack.c.l.b16 %v93
    %v343 = vunpack.c.h.b16 %v93
    %v344 = vunpack.c.l.b16 %v94
    %v345 = vunpack.c.h.b16 %v94
    %v346 = vunpack.c.l.b16 %v95
    %v347 = vunpack.c.h.b16 %v95
    %v348 = vunpack.c.l.b16 %v96
    %v349 = vunpack.c.h.b16 %v96
    %v350 = vunpack.c.l.b16 %v97
    %v351 = vunpack.c.h.b16 %v97
    %v352 = vunpack.c.l.b16 %v98
    %v353 = vunpack.c.h.b16 %v98
    %v354 = vunpack.c.l.b16 %v99
    %v355 = vunpack.c.h.b16 %v99
    %v356 = vunpack.c.l.b16 %v100
    %v357 = vunpack.c.h.b16 %v100
    %v358 = vunpack.c.l.b16 %v101
    %v359 = vunpack.c.h.b16 %v101
    %v360 = vunpack.c.l.b16 %v102
    %v361 = vunpack.c.h.b16 %v102
    %v362 = vunpack.c.l.b16 %v103
    %v363 = vunpack.c.h.b16 %v103
    %v364 = vunpack.c.l.b16 %v104
    %v365 = vunpack.c.h.b16 %v104
    %v366 = vunpack.c.l.b16 %v105
    %v367 = vunpack.c.h.b16 %v105
    %v368 = vunpack.c.l.b16 %v106
    %v369 = vunpack.c.h.b16 %v106
    %v370 = vunpack.c.l.b16 %v107
    %v371 = vunpack.c.h.b16 %v107
    %v372 = vunpack.c.l.b16 %v108
    %v373 = vunpack.c.h.b16 %v108
    %v374 = vunpack.c.l.b16 %v109
    %v375 = vunpack.c.h.b16 %v109
    %v376 = vunpack.c.l.b16 %v110
    %v377 = vunpack.c.h.b16 %v110
    %v378 = vunpack.c.l.b16 %v111
    %v379 = vunpack.c.h.b16 %v111
    %v380 = vunpack.c.l.b16 %v112
    %v381 = vunpack.c.h.b16 %v112
    %v382 = vunpack.c.l.b16 %v113
    %v383 = vunpack.c.h.b16 %v113
    %v384 = vunpack.c.l.b16 %v114
    %v385 = vunpack.c.h.b16 %v114
    %v386 = vunpack.c.l.b16 %v115
    %v387 = vunpack.c.h.b16 %v115
    %v388 = vunpack.c.l.b16 %v116
    %v389 = vunpack.c.h.b16 %v116
    %v390 = vunpack.c.l.b16 %v117
    %v391 = vunpack.c.h.b16 %v117
    %v392 = vunpack.c.l.b16 %v118
    %v393 = vunpack.c.h.b16 %v118
    %v394 = vunpack.c.l.b16 %v119
    %v395 = vunpack.c.h.b16 %v119
    %v396 = vunpack.c.l.b16 %v120
    %v397 = vunpack.c.h.b16 %v120
    %v398 = vunpack.c.l.b16 %v121
    %v399 = vunpack.c.h.b16 %v121
    %v400 = vunpack.c.l.b16 %v122
    %v401 = vunpack.c.h.b16 %v122
    %v402 = vunpack.c.l.b16 %v123
    %v403 = vunpack.c.h.b16 %v123
    %v404 = vunpack.c.l.b16 %v124
    %v405 = vunpack.c.h.b16 %v124
    %v406 = vunpack.c.l.b16 %v125
    %v407 = vunpack.c.h.b16 %v125
    %v408 = vunpack.c.l.b16 %v126
    %v409 = vunpack.c.h.b16 %v126
    %v410 = vunpack.c.l.b16 %v127
    %v411 = vunpack.c.h.b16 %v127
    %v412 = vunpack.c.l.b16 %v128
    %v413 = vunpack.c.h.b16 %v128
    %v414 = vunpack.c.l.b16 %v129
    %v415 = vunpack.c.h.b16 %v129
    %v416 = vunpack.c.l.b16 %v130
    %v417 = vunpack.c.h.b16 %v130
    %v418 = vunpack.c.l.b16 %v131
    %v419 = vunpack.c.h.b16 %v131
    %v420 = vunpack.c.l.b16 %v132
    %v421 = vunpack.c.h.b16 %v132
    %v422 = vunpack.c.l.b16 %v133
    %v423 = vunpack.c.h.b16 %v133
    %v424 = vunpack.c.l.b16 %v134
    %v425 = vunpack.c.h.b16 %v134
    %v426 = vunpack.c.l.b16 %v135
    %v427 = vunpack.c.h.b16 %v135
    %v428 = vunpack.c.l.b16 %v136
    %v429 = vunpack.c.h.b16 %v136
    %v430 = vunpack.c.l.b16 %v137
    %v431 = vunpack.c.h.b16 %v137
    %v432 = vunpack.c.l.b16 %v138
    %v433 = vunpack.c.h.b16 %v138
    %v434 = vunpack.c.l.b16 %v139
    %v435 = vunpack.c.h.b16 %v139
    %v436 = vunpack.c.l.b16 %v140
    %v437 = vunpack.c.h.b16 %v140
    %v438 = vunpack.c.l.b16 %v141
    %v439 = vunpack.c.h.b16 %v141
    %v440 = vunpack.c.l.b16 %v142
    %v441 = vunpack.c.h.b16 %v142
    %v442 = vunpack.c.l.b16 %v143
    %v443 = vunpack.c.h.b16 %v143
    %v444 = vunpack.c.l.b16 %v144
    %v445 = vunpack.c.h.b16 %v144
    %v446 = vunpack.c.l.b16 %v145
    %v447 = vunpack.c.h.b16 %v145
    %v448 = vunpack.c.l.b16 %v146
    %v449 = vunpack.c.h.b16 %v146
    %v450 = vunpack.c.l.b16 %v147
    %v451 = vunpack.c.h.b16 %v147
    %v452 = vunpack.c.l.b16 %v148
    %v453 = vunpack.c.h.b16 %v148
    %v454 = vunpack.c.l.b16 %v149
    %v455 = vunpack.c.h.b16 %v149
    %v456 = vunpack.c.l.b16 %v150
    %v457 = vunpack.c.h.b16 %v150
    %v458 = vunpack.c.l.b16 %v151
    %v459 = vunpack.c.h.b16 %v151
    %v460 = vunpack.c.l.b16 %v152
    %v461 = vunpack.c.h.b16 %v152
    %v462 = vunpack.c.l.b16 %v153
    %v463 = vunpack.c.h.b16 %v153
    %v464 = vunpack.c.l.b16 %v154
    %v465 = vunpack.c.h.b16 %v154
    %v466 = vunpack.c.l.b16 %v155
    %v467 = vunpack.c.h.b16 %v155
    %v468 = vunpack.c.l.b16 %v156
    %v469 = vunpack.c.h.b16 %v156
    %v470 = vunpack.c.l.b16 %v157
    %v471 = vunpack.c.h.b16 %v157
    %v472 = vunpack.c.l.b16 %v158
    %v473 = vunpack.c.h.b16 %v158
    %v474 = vunpack.c.l.b16 %v159
    %v475 = vunpack.c.h.b16 %v159
    %v476 = vunpack.c.l.b16 %v160
    %v477 = vunpack.c.h.b16 %v160
    %v478 = vunpack.c.l.b16 %v161
    %v479 = vunpack.c.h.b16 %v161
    %v480 = vunpack.c.l.b16 %v162
    %v481 = vunpack.c.h.b16 %v162
    %v482 = vunpack.c.l.b16 %v163
    %v483 = vunpack.c.h.b16 %v163
    %v484 = vunpack.c.l.b16 %v164
    %v485 = vunpack.c.h.b16 %v164
    %v486 = vunpack.c.l.b16 %v165
    %v487 = vunpack.c.h.b16 %v165
    %v488 = vunpack.c.l.b16 %v166
    %v489 = vunpack.c.h.b16 %v166
    %v490 = vunpack.c.l.b16 %v167
    %v491 = vunpack.c.h.b16 %v167
    %v492 = vpack.c.b16 %v298, %v296
    %v493 = vpack.c.b16 %v299, %v297
    %v494 = vpack.c.b16 %v302, %v300
    %v495 = vpack.c.b16 %v303, %v301
    %v496 = vpack.c.b16 %v306, %v304
    %v497 = vpack.c.b16 %v307, %v305
    %v498 = vpack.c.b16 %v310, %v308
    %v499 = vpack.c.b16 %v311, %v309
    %v500 = vpack.c.b16 %v314, %v312
    %v501 = vpack.c.b16 %v315, %v313
    %v502 = vpack.c.b16 %v318, %v316
    %v503 = vpack.c.b16 %v319, %v317
    %v504 = vpack.c.b16 %v322, %v320
    %v505 = vpack.c.b16 %v323, %v321
    %v506 = vpack.c.b16 %v326, %v324
    %v507 = vpack.c.b16 %v327, %v325
    %v508 = vpack.c.b16 %v330, %v328
    %v509 = vpack.c.b16 %v331, %v329
    %v510 = vpack.c.b16 %v334, %v332
    %v511 = vpack.c.b16 %v335, %v333
    %v512 = vpack.c.b16 %v338, %v336
    %v513 = vpack.c.b16 %v339, %v337
    %v514 = vpack.c.b16 %v342, %v340
    %v515 = vpack.c.b16 %v343, %v341
    %v516 = vpack.c.b16 %v346, %v344
    %v517 = vpack.c.b16 %v347, %v345
    %v518 = vpack.c.b16 %v350, %v348
    %v519 = vpack.c.b16 %v351, %v349
    %v520 = vpack.c.b16 %v354, %v352
    %v521 = vpack.c.b16 %v355, %v353
    %v522 = vpack.c.b16 %v358, %v356
    %v523 = vpack.c.b16 %v359, %v357
    %v524 = vpack.c.b16 %v362, %v360
    %v525 = vpack.c.b16 %v363, %v361
    %v526 = vpack.c.b16 %v366, %v364
    %v527 = vpack.c.b16 %v367, %v365
    %v528 = vpack.c.b16 %v370, %v368
    %v529 = vpack.c.b16 %v371, %v369
    %v530 = vpack.c.b16 %v374, %v372
    %v531 = vpack.c.b16 %v375, %v373
    %v532 = vpack.c.b16 %v378, %v376
    %v533 = vpack.c.b16 %v379, %v377
    %v534 = vpack.c.b16 %v382, %v380
    %v535 = vpack.c.b16 %v383, %v381
    %v536 = vpack.c.b16 %v386, %v384
    %v537 = vpack.c.b16 %v387, %v385
    %v538 = vpack.c.b16 %v390, %v388
    %v539 = vpack.c.b16 %v391, %v389
    %v540 = vpack.c.b16 %v394, %v392
    %v541 = vpack.c.b16 %v395, %v393
    %v542 = vpack.c.b16 %v398, %v396
    %v543 = vpack.c.b16 %v399, %v397
    %v544 = vpack.c.b16 %v402, %v400
    %v545 = vpack.c.b16 %v403, %v401
    %v546 = vpack.c.b16 %v406, %v404
    %v547 = vpack.c.b16 %v407, %v405
    %v548 = vpack.c.b16 %v410, %v408
    %v549 = vpack.c.b16 %v411, %v409
    %v550 = vpack.c.b16 %v414, %v412
    %v551 = vpack.c.b16 %v415, %v413
    %v552 = vpack.c.b16 %v418, %v416
    %v553 = vpack.c.b16 %v419, %v417
    %v554 = vpack.c.b16 %v422, %v420
    %v555 = vpack.c.b16 %v423, %v421
    %v556 = vpack.c.b16 %v426, %v424
    %v557 = vpack.c.b16 %v427, %v425
    %v558 = vpack.c.b16 %v430, %v428
    %v559 = vpack.c.b16 %v431, %v429
    %v560 = vpack.c.b16 %v434, %v432
    %v561 = vpack.c.b16 %v435, %v433
    %v562 = vpack.c.b16 %v438, %v436
    %v563 = vpack.c.b16 %v439, %v437
    %v564 = vpack.c.b16 %v442, %v440
    %v565 = vpack.c.b16 %v443, %v441
    %v566 = vpack.c.b16 %v446, %v444
    %v567 = vpack.c.b16 %v447, %v445
    %v568 = vpack.c.b16 %v450, %v448
    %v569 = vpack.c.b16 %v451, %v449
    %v570 = vpack.c.b16 %v454, %v452
    %v571 = vpack.c.b16 %v455, %v453
    %v572 = vpack.c.b16 %v458, %v456
    %v573 = vpack.c.b16 %v459, %v457
    %v574 = vpack.c.b16 %v462, %v460
    %v575 = vpack.c.b16 %v463, %v461
    %v576 = vpack.c.b16 %v466, %v464
    %v577 = vpack.c.b16 %v467, %v465
    %v578 = vpack.c.b16 %v470, %v468
    %v579 = vpack.c.b16 %v471, %v469
    %v580 = vpack.c.b16 %v474, %v472
    %v581 = vpack.c.b16 %v475, %v473
    %v582 = vpack.c.b16 %v478, %v476
    %v583 = vpack.c.b16 %v479, %v477
    %v584 = vpack.c.b16 %v482, %v480
    %v585 = vpack.c.b16 %v483, %v481
    %v586 = vpack.c.b16 %v486, %v484
    %v587 = vpack.c.b16 %v487, %v485
    %v588 = vpack.c.b16 %v490, %v488
    %v589 = vpack.c.b16 %v491, %v489
    %vm688 = vcmask 130048
    %v690 = vsel %vm688, %v191, 0
    %692 = vmatpush.bf16.msra.mxu0 %v506
    %693 = vmatpush.bf16.msra.mxu0 %v504
    %694 = vmatpush.bf16.msra.mxu0 %v502
    %695 = vmatpush.bf16.msra.mxu0 %v500
    %696 = vmatpush.bf16.msra.mxu0 %v498
    %697 = vmatpush.bf16.msra.mxu0 %v496
    %698 = vmatpush.bf16.msra.mxu0 %v494
    %699 = vmatpush.bf16.msra.mxu0 %v492
    %700 = vmatmul.bf16.gmra.mxu0 %v185
    %v701 = vpop.f32.mrf.mxu0
    %v702 = vadd.f32 %v170, %v701
    %v703 = vpop.f32.mrf.mxu0
    %704 = vdwg.mxu0
    %705 = vmatpush.bf16.msra.mxu0 %v522
    %706 = vmatpush.bf16.msra.mxu0 %v520
    %707 = vmatpush.bf16.msra.mxu0 %v518
    %708 = vmatpush.bf16.msra.mxu0 %v516
    %709 = vmatpush.bf16.msra.mxu0 %v514
    %710 = vmatpush.bf16.msra.mxu0 %v512
    %711 = vmatpush.bf16.msra.mxu0 %v510
    %712 = vmatpush.bf16.msra.mxu0 %v508
    %713 = vmatmul.bf16.gmra.mxu0 %v186
    %v714 = vpop.f32.mrf.mxu0
    %v715 = vadd.f32 %v702, %v714
    %v716 = vpop.f32.mrf.mxu0
    %717 = vdwg.mxu0
    %718 = vmatpush.bf16.msra.mxu0 %v538
    %719 = vmatpush.bf16.msra.mxu0 %v536
    %720 = vmatpush.bf16.msra.mxu0 %v534
    %721 = vmatpush.bf16.msra.mxu0 %v532
    %722 = vmatpush.bf16.msra.mxu0 %v530
    %723 = vmatpush.bf16.msra.mxu0 %v528
    %724 = vmatpush.bf16.msra.mxu0 %v526
    %725 = vmatpush.bf16.msra.mxu0 %v524
    %726 = vmatmul.bf16.gmra.mxu0 %v187
    %v727 = vpop.f32.mrf.mxu0
    %v728 = vadd.f32 %v715, %v727
    %v729 = vpop.f32.mrf.mxu0
    %730 = vdwg.mxu0
    %731 = vmatpush.bf16.msra.mxu0 %v554
    %732 = vmatpush.bf16.msra.mxu0 %v552
    %733 = vmatpush.bf16.msra.mxu0 %v550
    %734 = vmatpush.bf16.msra.mxu0 %v548
    %735 = vmatpush.bf16.msra.mxu0 %v546
    %736 = vmatpush.bf16.msra.mxu0 %v544
    %737 = vmatpush.bf16.msra.mxu0 %v542
    %738 = vmatpush.bf16.msra.mxu0 %v540
    %739 = vmatmul.bf16.gmra.mxu0 %v188
    %v740 = vpop.f32.mrf.mxu0
    %v741 = vadd.f32 %v728, %v740
    %v742 = vpop.f32.mrf.mxu0
    %743 = vdwg.mxu0
    %744 = vmatpush.bf16.msra.mxu0 %v570
    %745 = vmatpush.bf16.msra.mxu0 %v568
    %746 = vmatpush.bf16.msra.mxu0 %v566
    %747 = vmatpush.bf16.msra.mxu0 %v564
    %748 = vmatpush.bf16.msra.mxu0 %v562
    %749 = vmatpush.bf16.msra.mxu0 %v560
    %750 = vmatpush.bf16.msra.mxu0 %v558
    %751 = vmatpush.bf16.msra.mxu0 %v556
    %752 = vmatmul.bf16.gmra.mxu0 %v189
    %v753 = vpop.f32.mrf.mxu0
    %v754 = vadd.f32 %v741, %v753
    %v755 = vpop.f32.mrf.mxu0
    %756 = vdwg.mxu0
    %757 = vmatpush.bf16.msra.mxu0 %v586
    %758 = vmatpush.bf16.msra.mxu0 %v584
    %759 = vmatpush.bf16.msra.mxu0 %v582
    %760 = vmatpush.bf16.msra.mxu0 %v580
    %761 = vmatpush.bf16.msra.mxu0 %v578
    %762 = vmatpush.bf16.msra.mxu0 %v576
    %763 = vmatpush.bf16.msra.mxu0 %v574
    %764 = vmatpush.bf16.msra.mxu0 %v572
    %765 = vmatmul.bf16.gmra.mxu0 %v190
    %v766 = vpop.f32.mrf.mxu0
    %v767 = vadd.f32 %v754, %v766
    %v768 = vpop.f32.mrf.mxu0
    %769 = vdwg.mxu0
    %770 = vmatpush.bf16.msra.mxu0 0
    %771 = vmatpush.bf16.msra.mxu0 0
    %772 = vmatpush.bf16.msra.mxu0 0
    %773 = vmatpush.bf16.msra.mxu0 0
    %774 = vmatpush.bf16.msra.mxu0 0
    %775 = vmatpush.bf16.msra.mxu0 0
    %776 = vmatpush.bf16.msra.mxu0 0
    %777 = vmatpush.bf16.msra.mxu0 %v588
    %778 = vmatmul.bf16.gmra.mxu0 %v690
    %v779 = vpop.f32.mrf.mxu0
    %v780 = vadd.f32 %v767, %v779
    %v781 = vpop.f32.mrf.mxu0
    %782 = vdwg.mxu0
    %783 = vmatpush.bf16.msra.mxu0 %v507
    %784 = vmatpush.bf16.msra.mxu0 %v505
    %785 = vmatpush.bf16.msra.mxu0 %v503
    %786 = vmatpush.bf16.msra.mxu0 %v501
    %787 = vmatpush.bf16.msra.mxu0 %v499
    %788 = vmatpush.bf16.msra.mxu0 %v497
    %789 = vmatpush.bf16.msra.mxu0 %v495
    %790 = vmatpush.bf16.msra.mxu0 %v493
    %791 = vmatmul.bf16.gmra.mxu0 %v185
    %v792 = vpop.f32.mrf.mxu0
    %v793 = vadd.f32 %v171, %v792
    %v794 = vpop.f32.mrf.mxu0
    %795 = vdwg.mxu0
    %796 = vmatpush.bf16.msra.mxu0 %v523
    %797 = vmatpush.bf16.msra.mxu0 %v521
    %798 = vmatpush.bf16.msra.mxu0 %v519
    %799 = vmatpush.bf16.msra.mxu0 %v517
    %800 = vmatpush.bf16.msra.mxu0 %v515
    %801 = vmatpush.bf16.msra.mxu0 %v513
    %802 = vmatpush.bf16.msra.mxu0 %v511
    %803 = vmatpush.bf16.msra.mxu0 %v509
    %804 = vmatmul.bf16.gmra.mxu0 %v186
    %v805 = vpop.f32.mrf.mxu0
    %v806 = vadd.f32 %v793, %v805
    %v807 = vpop.f32.mrf.mxu0
    %808 = vdwg.mxu0
    %809 = vmatpush.bf16.msra.mxu0 %v539
    %810 = vmatpush.bf16.msra.mxu0 %v537
    %811 = vmatpush.bf16.msra.mxu0 %v535
    %812 = vmatpush.bf16.msra.mxu0 %v533
    %813 = vmatpush.bf16.msra.mxu0 %v531
    %814 = vmatpush.bf16.msra.mxu0 %v529
    %815 = vmatpush.bf16.msra.mxu0 %v527
    %816 = vmatpush.bf16.msra.mxu0 %v525
    %817 = vmatmul.bf16.gmra.mxu0 %v187
    %v818 = vpop.f32.mrf.mxu0
    %v819 = vadd.f32 %v806, %v818
    %v820 = vpop.f32.mrf.mxu0
    %821 = vdwg.mxu0
    %822 = vmatpush.bf16.msra.mxu0 %v555
    %823 = vmatpush.bf16.msra.mxu0 %v553
    %824 = vmatpush.bf16.msra.mxu0 %v551
    %825 = vmatpush.bf16.msra.mxu0 %v549
    %826 = vmatpush.bf16.msra.mxu0 %v547
    %827 = vmatpush.bf16.msra.mxu0 %v545
    %828 = vmatpush.bf16.msra.mxu0 %v543
    %829 = vmatpush.bf16.msra.mxu0 %v541
    %830 = vmatmul.bf16.gmra.mxu0 %v188
    %v831 = vpop.f32.mrf.mxu0
    %v832 = vadd.f32 %v819, %v831
    %v833 = vpop.f32.mrf.mxu0
    %834 = vdwg.mxu0
    %835 = vmatpush.bf16.msra.mxu0 %v571
    %836 = vmatpush.bf16.msra.mxu0 %v569
    %837 = vmatpush.bf16.msra.mxu0 %v567
    %838 = vmatpush.bf16.msra.mxu0 %v565
    %839 = vmatpush.bf16.msra.mxu0 %v563
    %840 = vmatpush.bf16.msra.mxu0 %v561
    %841 = vmatpush.bf16.msra.mxu0 %v559
    %842 = vmatpush.bf16.msra.mxu0 %v557
    %843 = vmatmul.bf16.gmra.mxu0 %v189
    %v844 = vpop.f32.mrf.mxu0
    %v845 = vadd.f32 %v832, %v844
    %v846 = vpop.f32.mrf.mxu0
    %847 = vdwg.mxu0
    %848 = vmatpush.bf16.msra.mxu0 %v587
    %849 = vmatpush.bf16.msra.mxu0 %v585
    %850 = vmatpush.bf16.msra.mxu0 %v583
    %851 = vmatpush.bf16.msra.mxu0 %v581
    %852 = vmatpush.bf16.msra.mxu0 %v579
    %853 = vmatpush.bf16.msra.mxu0 %v577
    %854 = vmatpush.bf16.msra.mxu0 %v575
    %855 = vmatpush.bf16.msra.mxu0 %v573
    %856 = vmatmul.bf16.gmra.mxu0 %v190
    %v857 = vpop.f32.mrf.mxu0
    %v858 = vadd.f32 %v845, %v857
    %v859 = vpop.f32.mrf.mxu0
    %860 = vdwg.mxu0
    %861 = vmatpush.bf16.msra.mxu0 0
    %862 = vmatpush.bf16.msra.mxu0 0
    %863 = vmatpush.bf16.msra.mxu0 0
    %864 = vmatpush.bf16.msra.mxu0 0
    %865 = vmatpush.bf16.msra.mxu0 0
    %866 = vmatpush.bf16.msra.mxu0 0
    %867 = vmatpush.bf16.msra.mxu0 0
    %868 = vmatpush.bf16.msra.mxu0 %v589
    %869 = vmatmul.bf16.gmra.mxu0 %v690
    %v870 = vpop.f32.mrf.mxu0
    %v871 = vadd.f32 %v858, %v870
    %v872 = vpop.f32.mrf.mxu0
    %873 = vdwg.mxu0
    %v874 = vmax.f32 %v780, 0.0
    %v875 = vmax.f32 %v871, 0.0
    %v876 = vpack.c.bf16 %v874, %v874
    %v877 = vpack.c.bf16 %v875, %v875
    %v878 = vld [vmem:[#allocation5] sm:$0xf]
    %v879 = vld [vmem:[#allocation5 + $0x4] sm:$0xf]
    %v880 = vld [vmem:[#allocation5 + $0x8] sm:$0xf]
    %v881 = vld [vmem:[#allocation5 + $0xc] sm:$0xf]
    %v882 = vld [vmem:[#allocation5 + $0x10] sm:$0xf]
    %v883 = vld [vmem:[#allocation5 + $0x14] sm:$0xf]
    %v884 = vld [vmem:[#allocation5 + $0x18] sm:$0xf]
    %v885 = vld [vmem:[#allocation5 + $0x1c] sm:$0xf]
    %v886 = vld [vmem:[#allocation5 + $0x20] sm:$0xf]
    %v887 = vld [vmem:[#allocation5 + $0x24] sm:$0xf]
    %v888 = vld [vmem:[#allocation5 + $0x28] sm:$0xf]
    %v889 = vld [vmem:[#allocation5 + $0x2c] sm:$0xf]
    %v890 = vld [vmem:[#allocation5 + $0x30] sm:$0xf]
    %v891 = vld [vmem:[#allocation5 + $0x34] sm:$0xf]
    %v892 = vld [vmem:[#allocation5 + $0x38] sm:$0xf]
    %v893 = vld [vmem:[#allocation5 + $0x3c] sm:$0xf]
    %v894 = vld [vmem:[#allocation5 + $0x40] sm:$0xf]
    %v895 = vld [vmem:[#allocation5 + $0x44] sm:$0xf]
    %v896 = vld [vmem:[#allocation5 + $0x48] sm:$0xf]
    %v897 = vld [vmem:[#allocation5 + $0x4c] sm:$0xf]
    %v898 = vld [vmem:[#allocation5 + $0x50] sm:$0xf]
    %v899 = vld [vmem:[#allocation5 + $0x54] sm:$0xf]
    %v900 = vld [vmem:[#allocation5 + $0x58] sm:$0xf]
    %v901 = vld [vmem:[#allocation5 + $0x5c] sm:$0xf]
    %v902 = vld [vmem:[#allocation5 + $0x60] sm:$0xf]
    %v903 = vld [vmem:[#allocation5 + $0x64] sm:$0xf]
    %v904 = vld [vmem:[#allocation5 + $0x68] sm:$0xf]
    %v905 = vld [vmem:[#allocation5 + $0x6c] sm:$0xf]
    %v906 = vld [vmem:[#allocation5 + $0x70] sm:$0xf]
    %v907 = vld [vmem:[#allocation5 + $0x74] sm:$0xf]
    %v908 = vld [vmem:[#allocation5 + $0x78] sm:$0xf]
    %v909 = vld [vmem:[#allocation5 + $0x7c] sm:$0xf]
    %v910 = vld [vmem:[%s4] sm:$0x1]
    %v912 = vperm.slane %v910, 0
    %v946 = vunpack.c.l.b16 %v878
    %v947 = vunpack.c.l.b16 %v879
    %v948 = vunpack.c.l.b16 %v880
    %v949 = vunpack.c.l.b16 %v881
    %v950 = vunpack.c.l.b16 %v882
    %v951 = vunpack.c.l.b16 %v883
    %v952 = vunpack.c.l.b16 %v884
    %v953 = vunpack.c.l.b16 %v885
    %v954 = vunpack.c.l.b16 %v886
    %v955 = vunpack.c.l.b16 %v887
    %v956 = vunpack.c.l.b16 %v888
    %v957 = vunpack.c.l.b16 %v889
    %v958 = vunpack.c.l.b16 %v890
    %v959 = vunpack.c.l.b16 %v891
    %v960 = vunpack.c.l.b16 %v892
    %v961 = vunpack.c.l.b16 %v893
    %v962 = vunpack.c.l.b16 %v894
    %v963 = vunpack.c.l.b16 %v895
    %v964 = vunpack.c.l.b16 %v896
    %v965 = vunpack.c.l.b16 %v897
    %v966 = vunpack.c.l.b16 %v898
    %v967 = vunpack.c.l.b16 %v899
    %v968 = vunpack.c.l.b16 %v900
    %v969 = vunpack.c.l.b16 %v901
    %v970 = vunpack.c.l.b16 %v902
    %v971 = vunpack.c.l.b16 %v903
    %v972 = vunpack.c.l.b16 %v904
    %v973 = vunpack.c.l.b16 %v905
    %v974 = vunpack.c.l.b16 %v906
    %v975 = vunpack.c.l.b16 %v907
    %v976 = vunpack.c.l.b16 %v908
    %v977 = vunpack.c.l.b16 %v909
    %v978 = vpack.c.b16 %v947, %v946
    %v979 = vpack.c.b16 %v949, %v948
    %v980 = vpack.c.b16 %v951, %v950
    %v981 = vpack.c.b16 %v953, %v952
    %v982 = vpack.c.b16 %v955, %v954
    %v983 = vpack.c.b16 %v957, %v956
    %v984 = vpack.c.b16 %v959, %v958
    %v985 = vpack.c.b16 %v961, %v960
    %v986 = vpack.c.b16 %v963, %v962
    %v987 = vpack.c.b16 %v965, %v964
    %v988 = vpack.c.b16 %v967, %v966
    %v989 = vpack.c.b16 %v969, %v968
    %v990 = vpack.c.b16 %v971, %v970
    %v991 = vpack.c.b16 %v973, %v972
    %v992 = vpack.c.b16 %v975, %v974
    %v993 = vpack.c.b16 %v977, %v976
    %1010 = vmatpush.bf16.msra.mxu0 %v985
    %1011 = vmatpush.bf16.msra.mxu0 %v984
    %1012 = vmatpush.bf16.msra.mxu0 %v983
    %1013 = vmatpush.bf16.msra.mxu0 %v982
    %1014 = vmatpush.bf16.msra.mxu0 %v981
    %1015 = vmatpush.bf16.msra.mxu0 %v980
    %1016 = vmatpush.bf16.msra.mxu0 %v979
    %1017 = vmatpush.bf16.msra.mxu0 %v978
    %1018 = vmatmul.bf16.gmra.mxu0 %v876
    %v1019 = vpop.f32.mrf.mxu0
    %v1020 = vadd.f32 %v912, %v1019
    %v1021 = vpop.f32.mrf.mxu0
    %1022 = vdwg.mxu0
    %1023 = vmatpush.bf16.msra.mxu0 %v993
    %1024 = vmatpush.bf16.msra.mxu0 %v992
    %1025 = vmatpush.bf16.msra.mxu0 %v991
    %1026 = vmatpush.bf16.msra.mxu0 %v990
    %1027 = vmatpush.bf16.msra.mxu0 %v989
    %1028 = vmatpush.bf16.msra.mxu0 %v988
    %1029 = vmatpush.bf16.msra.mxu0 %v987
    %1030 = vmatpush.bf16.msra.mxu0 %v986
    %1031 = vmatmul.bf16.gmra.mxu0 %v877
    %v1032 = vpop.f32.mrf.mxu0
    %v1033 = vadd.f32 %v1020, %v1032
    %v1034 = vpop.f32.mrf.mxu0
    %1035 = vdwg.mxu0
    %v1036 = vmax.f32 %v1033, 0.0
    %v1037 = vpack.c.bf16 %v1036, %v1036
    %v1038 = vld [vmem:[%s5] sm:$0xf]
    %v1039 = vld [vmem:[%s5 + $0x4] sm:$0xf]
    %v1040 = vld [vmem:[%s5 + $0x8] sm:$0xf]
    %v1041 = vld [vmem:[%s5 + $0xc] sm:$0xf]
    %v1042 = vld [vmem:[%s5 + $0x10] sm:$0xf]
    %v1043 = vld [vmem:[%s5 + $0x14] sm:$0xf]
    %v1044 = vld [vmem:[%s5 + $0x18] sm:$0xf]
    %v1045 = vld [vmem:[%s5 + $0x1c] sm:$0xf]
    %v1046 = vld [vmem:[%s5 + $0x20] sm:$0xf]
    %v1047 = vld [vmem:[%s5 + $0x24] sm:$0xf]
    %v1048 = vld [vmem:[%s5 + $0x28] sm:$0xf]
    %v1049 = vld [vmem:[%s5 + $0x2c] sm:$0xf]
    %v1050 = vld [vmem:[%s5 + $0x30] sm:$0xf]
    %v1051 = vld [vmem:[%s5 + $0x34] sm:$0xf]
    %v1052 = vld [vmem:[%s5 + $0x38] sm:$0xf]
    %v1053 = vld [vmem:[%s5 + $0x3c] sm:$0xf]
    %v1054 = vld [vmem:[%s6] sm:$0x1]
    %v1056 = vperm.slane %v1054, 0
    %v1074 = vunpack.c.l.b16 %v1038
    %v1075 = vunpack.c.l.b16 %v1039
    %v1076 = vunpack.c.l.b16 %v1040
    %v1077 = vunpack.c.l.b16 %v1041
    %v1078 = vunpack.c.l.b16 %v1042
    %v1079 = vunpack.c.l.b16 %v1043
    %v1080 = vunpack.c.l.b16 %v1044
    %v1081 = vunpack.c.l.b16 %v1045
    %v1082 = vunpack.c.l.b16 %v1046
    %v1083 = vunpack.c.l.b16 %v1047
    %v1084 = vunpack.c.l.b16 %v1048
    %v1085 = vunpack.c.l.b16 %v1049
    %v1086 = vunpack.c.l.b16 %v1050
    %v1087 = vunpack.c.l.b16 %v1051
    %v1088 = vunpack.c.l.b16 %v1052
    %v1089 = vunpack.c.l.b16 %v1053
    %v1090 = vpack.c.b16 %v1075, %v1074
    %v1091 = vpack.c.b16 %v1077, %v1076
    %v1092 = vpack.c.b16 %v1079, %v1078
    %v1093 = vpack.c.b16 %v1081, %v1080
    %v1094 = vpack.c.b16 %v1083, %v1082
    %v1095 = vpack.c.b16 %v1085, %v1084
    %v1096 = vpack.c.b16 %v1087, %v1086
    %v1097 = vpack.c.b16 %v1089, %v1088
    %1106 = vmatpush.bf16.msra.mxu0 %v1097
    %1107 = vmatpush.bf16.msra.mxu0 %v1096
    %1108 = vmatpush.bf16.msra.mxu0 %v1095
    %1109 = vmatpush.bf16.msra.mxu0 %v1094
    %1110 = vmatpush.bf16.msra.mxu0 %v1093
    %1111 = vmatpush.bf16.msra.mxu0 %v1092
    %1112 = vmatpush.bf16.msra.mxu0 %v1091
    %1113 = vmatpush.bf16.msra.mxu0 %v1090
    %1114 = vmatmul.bf16.gmra.mxu0 %v1037
    %v1115 = vpop.f32.mrf.mxu0
    %v1116 = vadd.f32 %v1056, %v1115
    %v1117 = vpop.f32.mrf.mxu0
    %1118 = vdwg.mxu0
    %v1119 = vmax.f32 %v1116, 0.0
    %v1120 = vpack.c.bf16 %v1119, %v1119
    %v1121 = vld [vmem:[%s7] sm:$0xf]
    %v1122 = vld [vmem:[%s7 + $0x4] sm:$0xf]
    %v1123 = vld [vmem:[%s7 + $0x8] sm:$0xf]
    %v1124 = vld [vmem:[%s7 + $0xc] sm:$0xf]
    %v1125 = vld [vmem:[%s7 + $0x10] sm:$0xf]
    %v1126 = vld [vmem:[%s7 + $0x14] sm:$0xf]
    %v1127 = vld [vmem:[%s7 + $0x18] sm:$0xf]
    %v1128 = vld [vmem:[%s7 + $0x1c] sm:$0xf]
    %v1129 = vld [vmem:[%s8] sm:$0x1]
    %v1131 = vperm.slane %v1129, 0
    %v1141 = vunpack.c.l.b16 %v1121
    %v1142 = vunpack.c.l.b16 %v1122
    %v1143 = vunpack.c.l.b16 %v1123
    %v1144 = vunpack.c.l.b16 %v1124
    %v1145 = vunpack.c.l.b16 %v1125
    %v1146 = vunpack.c.l.b16 %v1126
    %v1147 = vunpack.c.l.b16 %v1127
    %v1148 = vunpack.c.l.b16 %v1128
    %v1149 = vpack.c.b16 %v1142, %v1141
    %v1150 = vpack.c.b16 %v1144, %v1143
    %v1151 = vpack.c.b16 %v1146, %v1145
    %v1152 = vpack.c.b16 %v1148, %v1147
    %vm1157 = vcmask 523264
    %v1159 = vsel %vm1157, %v1120, 0
    %1161 = vmatpush.bf16.msra.mxu0 0
    %1162 = vmatpush.bf16.msra.mxu0 0
    %1163 = vmatpush.bf16.msra.mxu0 0
    %1164 = vmatpush.bf16.msra.mxu0 0
    %1165 = vmatpush.bf16.msra.mxu0 %v1152
    %1166 = vmatpush.bf16.msra.mxu0 %v1151
    %1167 = vmatpush.bf16.msra.mxu0 %v1150
    %1168 = vmatpush.bf16.msra.mxu0 %v1149
    %1169 = vmatmul.bf16.gmra.mxu0 %v1159
    %v1170 = vpop.f32.mrf.mxu0
    %v1171 = vadd.f32 %v1131, %v1170
    %v1172 = vpop.f32.mrf.mxu0
    %1173 = vdwg.mxu0
    %v1174 = vlaneseq
    %v1175 = vand.u32 %v1174, 127
    %vm1176 = vcmp.lt.s32.totalorder %v1175, 10
    %v1177 = vsel %vm1176, %v1171, -1e+30
    %1178 = vmax.xlane.f32.xlu0 %v1177
    %v1179 = vpop.xlane.xlu0 %1178
    %v1180 = vsub.f32 %v1177, %v1179
    %v1181 = vmul.f32 %v1180, 1.442695
    %v1182 = vpow.pop %v1181
    %1183 = vadd.xlane.f32.xlu0 %v1182
    %v1184 = vpop.xlane.xlu0 %1183
    %v1185 = vlog2.pop %v1184
    %v1186 = vmul.f32 %v1185, 0.6931472
    %v1187 = vsub.f32 %v1180, %v1186
    %1188 = vst [vmem:[#allocation7] sm:$0xff] %v1187
    // Predicated region
    $region46: #{tpu_custom_call.1} parent=1 // pred_check
      _
    $region47: #{tpu_custom_call.1} parent=1 // pred_check_branch
      %1190 = sbr.rel (0) target = $region49
    $region48: #{tpu_custom_call.1} parent=1 // pred_region
      %1192 = vsyncadd [#allocation4], 0
      %s1194 = sshll.u32 [#allocation7], 4
      %s1195 = int_to_ptr.vmem [resolvable:$true] %s1194
      %s1196 = sshll.u32 %s9, 4
      %s1197 = int_to_ptr.hbm [resolvable:$true] %s1196
      %1199 = dma.vmem_to_hbm [thread:$0]  %s1195, 128, %s1197, [#allocation4]
    $region49: #{tpu_custom_call.1} parent=1 // pred_fallthru
      _
    // Predicated region
    $region50: #{tpu_custom_call.1} parent=1 // pred_check
      _
    $region51: #{tpu_custom_call.1} parent=1 // pred_check_branch
      %1201 = sbr.rel (0) target = $region53
    $region52: #{tpu_custom_call.1} parent=1 // pred_region
      %1203 = dma.done [#allocation4], 128
    $region53: #{tpu_custom_call.1} parent=1 // pred_fallthru
      _
    %1204 = vsyncpa [#allocation3], 1
    %1205 = vsyncpa [#allocation6], 1
    %1206 = vsyncpa [#allocation4], 1

</llo_original>
